<compile_context>
chip_gen: v7x
topology: tpu7x:2x2x1
jax: 0.10.0
libtpu: 0.0.40
codegen_flags: <defaults>
</compile_context>

<pallas_src>
import functools

import jax
import jax.numpy as jnp
from jax.experimental import pallas as pl
from jax.experimental.pallas import tpu as pltpu


def _round_up(n, m):
    return ((n + m - 1) // m) * m


def _generator_kernel(x_ref, w1_ref, b1_ref, w2_ref, b2_ref, w3_ref, b3_ref,
                      o_ref):
    """Fused 3-layer MLP for one batch tile.

    Matmul operands are bf16 (MXU-native on v6e/v7x, 2x rate on v5e) with f32
    accumulation; bias add + tanh run in f32 on the VPU/EUP.  The output tile
    is a full 128-lane slab, so stores are unmasked.
    """
    x = x_ref[...]                                    # bf16 [tb, nz]
    h1 = jnp.tanh(
        jnp.dot(x, w1_ref[...], preferred_element_type=jnp.float32)
        + b1_ref[...])                                # f32 [tb, 128]
    h2 = jnp.tanh(
        jnp.dot(h1.astype(jnp.bfloat16), w2_ref[...],
                preferred_element_type=jnp.float32)
        + b2_ref[...])                                # f32 [tb, 128]
    out = (jnp.dot(h2.astype(jnp.bfloat16), w3_ref[...],
                   preferred_element_type=jnp.float32)
           + b3_ref[...])                             # f32 [tb, nc_pad]
    o_ref[...] = out.astype(o_ref.dtype)


@functools.partial(jax.jit, static_argnames=("block_b",))
def generator_forward(x, params, block_b=512):
    """Runs the Generator MLP via a fused Pallas kernel.

    x:      [B, nz] float32
    params: dict with w1 [nz,128], b1 [1,128], w2 [128,128], b2 [1,128],
            w3 [128,nc], b3 [1,nc]   (all float32)
    """
    B, nz = x.shape
    hidden = params["w1"].shape[1]
    nc = params["w3"].shape[1]

    # Effective batch tile: big enough to amortize the ~0.35 us per-step
    # pipeline overhead and fill the MXU rows, but never larger than the
    # (8-aligned) batch itself so tiny demo batches don't over-pad.
    tb = min(block_b, _round_up(B, 8))
    padded_B = _round_up(B, tb)

    # Lane-dense output: pad the last layer to a multiple of 128 lanes so the
    # output block lowers to unmasked full-lane stores.
    nc_pad = _round_up(nc, 128)

    # Cast / pad operands in the wrapper (done once per call, outside kernel).
    xb = x.astype(jnp.bfloat16)
    if padded_B != B:
        xb = jnp.pad(xb, ((0, padded_B - B), (0, 0)))

    w1 = params["w1"].astype(jnp.bfloat16)
    w2 = params["w2"].astype(jnp.bfloat16)
    w3 = jnp.pad(params["w3"],
                 ((0, 0), (0, nc_pad - nc))).astype(jnp.bfloat16)
    b1 = params["b1"].astype(jnp.float32)
    b2 = params["b2"].astype(jnp.float32)
    b3 = jnp.pad(params["b3"], ((0, 0), (0, nc_pad - nc))).astype(jnp.float32)

    grid = (padded_B // tb,)

    # Weights/biases use constant index maps -> fetched once, held resident
    # across grid steps by the auto-pipeliner.  Only x / out tile over batch.
    in_specs = [
        pl.BlockSpec((tb, nz), lambda i: (i, 0)),          # x tile (bf16)
        pl.BlockSpec((nz, hidden), lambda i: (0, 0)),       # w1 (bf16)
        pl.BlockSpec((1, hidden), lambda i: (0, 0)),        # b1 (f32)
        pl.BlockSpec((hidden, hidden), lambda i: (0, 0)),   # w2 (bf16)
        pl.BlockSpec((1, hidden), lambda i: (0, 0)),        # b2 (f32)
        pl.BlockSpec((hidden, nc_pad), lambda i: (0, 0)),   # w3 (bf16, padded)
        pl.BlockSpec((1, nc_pad), lambda i: (0, 0)),        # b3 (f32, padded)
    ]
    out_spec = pl.BlockSpec((tb, nc_pad), lambda i: (i, 0))

    out = pl.pallas_call(
        _generator_kernel,
        out_shape=jax.ShapeDtypeStruct((padded_B, nc_pad), jnp.float32),
        grid_spec=pltpu.PrefetchScalarGridSpec(
            num_scalar_prefetch=0,
            grid=grid,
            in_specs=in_specs,
            out_specs=out_spec,
        ),
        compiler_params=pltpu.CompilerParams(
            dimension_semantics=("parallel",)),   # splits batch over v7x's 2 TCs
    )(xb, w1, b1, w2, b2, w3, b3)

    return out[:B, :nc]


def init_generator_params(key, nz, nc, hidden=128):
    """Deterministic init mirroring nn.Linear's default U(-1/sqrt(fan_in), +)."""
    keys = jax.random.split(key, 6)

    def linear_init(kw, kb, fan_in, fan_out):
        bound = 1.0 / jnp.sqrt(fan_in)
        w = jax.random.uniform(kw, (fan_in, fan_out), jnp.float32,
                               minval=-bound, maxval=bound)
        b = jax.random.uniform(kb, (1, fan_out), jnp.float32,
                               minval=-bound, maxval=bound)
        return w, b

    w1, b1 = linear_init(keys[0], keys[1], nz, hidden)
    w2, b2 = linear_init(keys[2], keys[3], hidden, hidden)
    w3, b3 = linear_init(keys[4], keys[5], hidden, nc)
    return {"w1": w1, "b1": b1, "w2": w2, "b2": b2, "w3": w3, "b3": b3}


def generator_reference(x, p):
    h1 = jnp.tanh(x @ p["w1"] + p["b1"])
    h2 = jnp.tanh(h1 @ p["w2"] + p["b2"])
    return h2 @ p["w3"] + p["b3"]


if __name__ == "__main__":
    nz, nc, batch = 4, 2, 8   # small shapes consistent with the MLP generator
    key = jax.random.PRNGKey(0)
    k_params, k_x = jax.random.split(key)

    params = init_generator_params(k_params, nz, nc)
    x = jax.random.normal(k_x, (batch, nz), dtype=jnp.float32)

    out = generator_forward(x, params)          # default block_b=512, clamps to 8
    out = jax.block_until_ready(out)

    ref = generator_reference(x, params)
    assert out.shape == (batch, nc)
    # bf16 matmul operands (f32 accumulation) -> slightly looser tolerance.
    assert jnp.allclose(out, ref, atol=3e-2, rtol=3e-2), "mismatch vs reference"

    print("KERNEL_OK")
</pallas_src>

<mosaic_0001>
module attributes {stable_mosaic.version = 11 : i64} {
  func.func @_generator_kernel(%arg0: i32, %arg1: memref<8x4xbf16, #tpu.memory_space<vmem>>, %arg2: memref<4x128xbf16, #tpu.memory_space<vmem>>, %arg3: memref<1x128xf32, #tpu.memory_space<vmem>>, %arg4: memref<128x128xbf16, #tpu.memory_space<vmem>>, %arg5: memref<1x128xf32, #tpu.memory_space<vmem>>, %arg6: memref<128x128xbf16, #tpu.memory_space<vmem>>, %arg7: memref<1x128xf32, #tpu.memory_space<vmem>>, %arg8: memref<8x128xf32, #tpu.memory_space<vmem>>) attributes {dimension_semantics = [#tpu.dimension_semantics<parallel>], iteration_bounds = array<i64: 1>, scalar_prefetch = 0 : i64, scratch_operands = 0 : i64, tpu.core_type = #tpu.core_type<tc>, window_params = [{transform_indices = @transform_0, window_bounds = array<i64: 8, 4>}, {pipeline_mode = #tpu.pipeline_mode<synchronous>, transform_indices = @transform_1, window_bounds = array<i64: 4, 128>}, {pipeline_mode = #tpu.pipeline_mode<synchronous>, transform_indices = @transform_2, window_bounds = array<i64: 1, 128>}, {pipeline_mode = #tpu.pipeline_mode<synchronous>, transform_indices = @transform_3, window_bounds = array<i64: 128, 128>}, {pipeline_mode = #tpu.pipeline_mode<synchronous>, transform_indices = @transform_4, window_bounds = array<i64: 1, 128>}, {pipeline_mode = #tpu.pipeline_mode<synchronous>, transform_indices = @transform_5, window_bounds = array<i64: 128, 128>}, {pipeline_mode = #tpu.pipeline_mode<synchronous>, transform_indices = @transform_6, window_bounds = array<i64: 1, 128>}, {transform_indices = @transform_7, window_bounds = array<i64: 8, 128>}]} {
    %c0 = arith.constant 0 : index
    %c0_0 = arith.constant 0 : index
    %0 = vector.load %arg1[%c0, %c0_0] : memref<8x4xbf16, #tpu.memory_space<vmem>>, vector<8x4xbf16>
    %c0_1 = arith.constant 0 : index
    %c0_2 = arith.constant 0 : index
    %1 = vector.load %arg2[%c0_1, %c0_2] : memref<4x128xbf16, #tpu.memory_space<vmem>>, vector<4x128xbf16>
    %cst = arith.constant dense<0.000000e+00> : vector<8x128xf32>
    %2 = tpu.matmul %0, %1, %cst {dimension_numbers = #tpu.dot_dimension_numbers<[1], [0], [0], [1], [0, 0, 1, 1], [], []>} : vector<8x4xbf16>, vector<4x128xbf16>, vector<8x128xf32> -> vector<8x128xf32>
    %c0_3 = arith.constant 0 : index
    %c0_4 = arith.constant 0 : index
    %3 = vector.load %arg3[%c0_3, %c0_4] : memref<1x128xf32, #tpu.memory_space<vmem>>, vector<1x128xf32>
    %4 = vector.broadcast %3 : vector<1x128xf32> to vector<8x128xf32>
    %5 = arith.addf %2, %4 : vector<8x128xf32>
    %6 = math.tanh %5 : vector<8x128xf32>
    %7 = arith.truncf %6 : vector<8x128xf32> to vector<8x128xbf16>
    %c0_5 = arith.constant 0 : index
    %c0_6 = arith.constant 0 : index
    %8 = vector.load %arg4[%c0_5, %c0_6] : memref<128x128xbf16, #tpu.memory_space<vmem>>, vector<128x128xbf16>
    %cst_7 = arith.constant dense<0.000000e+00> : vector<8x128xf32>
    %9 = tpu.matmul %7, %8, %cst_7 {dimension_numbers = #tpu.dot_dimension_numbers<[1], [0], [0], [1], [0, 0, 1, 1], [], []>} : vector<8x128xbf16>, vector<128x128xbf16>, vector<8x128xf32> -> vector<8x128xf32>
    %c0_8 = arith.constant 0 : index
    %c0_9 = arith.constant 0 : index
    %10 = vector.load %arg5[%c0_8, %c0_9] : memref<1x128xf32, #tpu.memory_space<vmem>>, vector<1x128xf32>
    %11 = vector.broadcast %10 : vector<1x128xf32> to vector<8x128xf32>
    %12 = arith.addf %9, %11 : vector<8x128xf32>
    %13 = math.tanh %12 : vector<8x128xf32>
    %14 = arith.truncf %13 : vector<8x128xf32> to vector<8x128xbf16>
    %c0_10 = arith.constant 0 : index
    %c0_11 = arith.constant 0 : index
    %15 = vector.load %arg6[%c0_10, %c0_11] : memref<128x128xbf16, #tpu.memory_space<vmem>>, vector<128x128xbf16>
    %cst_12 = arith.constant dense<0.000000e+00> : vector<8x128xf32>
    %16 = tpu.matmul %14, %15, %cst_12 {dimension_numbers = #tpu.dot_dimension_numbers<[1], [0], [0], [1], [0, 0, 1, 1], [], []>} : vector<8x128xbf16>, vector<128x128xbf16>, vector<8x128xf32> -> vector<8x128xf32>
    %c0_13 = arith.constant 0 : index
    %c0_14 = arith.constant 0 : index
    %17 = vector.load %arg7[%c0_13, %c0_14] : memref<1x128xf32, #tpu.memory_space<vmem>>, vector<1x128xf32>
    %18 = vector.broadcast %17 : vector<1x128xf32> to vector<8x128xf32>
    %19 = arith.addf %16, %18 : vector<8x128xf32>
    %c0_15 = arith.constant 0 : index
    %c0_16 = arith.constant 0 : index
    %20 = vector.load %arg8[%c0_15, %c0_16] : memref<8x128xf32, #tpu.memory_space<vmem>>, vector<8x128xf32>
    tpu.vector_store %arg8[%c0_15, %c0_16], %19 {strides = array<i32>} : memref<8x128xf32, #tpu.memory_space<vmem>>, vector<8x128xf32>,
    return
  }
  func.func @transform_0(%arg0: i32) -> (i32, i32) {
    %c0_i32 = arith.constant 0 : i32
    %c0_i32_0 = arith.constant 0 : i32
    return %arg0, %c0_i32 : i32, i32
  }
  func.func @transform_1(%arg0: i32) -> (i32, i32) {
    %c0_i32 = arith.constant 0 : i32
    %c0_i32_0 = arith.constant 0 : i32
    %c0_i32_1 = arith.constant 0 : i32
    return %c0_i32, %c0_i32_0 : i32, i32
  }
  func.func @transform_2(%arg0: i32) -> (i32, i32) {
    %c0_i32 = arith.constant 0 : i32
    %c0_i32_0 = arith.constant 0 : i32
    %c0_i32_1 = arith.constant 0 : i32
    return %c0_i32, %c0_i32_0 : i32, i32
  }
  func.func @transform_3(%arg0: i32) -> (i32, i32) {
    %c0_i32 = arith.constant 0 : i32
    %c0_i32_0 = arith.constant 0 : i32
    %c0_i32_1 = arith.constant 0 : i32
    return %c0_i32, %c0_i32_0 : i32, i32
  }
  func.func @transform_4(%arg0: i32) -> (i32, i32) {
    %c0_i32 = arith.constant 0 : i32
    %c0_i32_0 = arith.constant 0 : i32
    %c0_i32_1 = arith.constant 0 : i32
    return %c0_i32, %c0_i32_0 : i32, i32
  }
  func.func @transform_5(%arg0: i32) -> (i32, i32) {
    %c0_i32 = arith.constant 0 : i32
    %c0_i32_0 = arith.constant 0 : i32
    %c0_i32_1 = arith.constant 0 : i32
    return %c0_i32, %c0_i32_0 : i32, i32
  }
  func.func @transform_6(%arg0: i32) -> (i32, i32) {
    %c0_i32 = arith.constant 0 : i32
    %c0_i32_0 = arith.constant 0 : i32
    %c0_i32_1 = arith.constant 0 : i32
    return %c0_i32, %c0_i32_0 : i32, i32
  }
  func.func @transform_7(%arg0: i32) -> (i32, i32) {
    %c0_i32 = arith.constant 0 : i32
    %c0_i32_0 = arith.constant 0 : i32
    return %arg0, %c0_i32 : i32, i32
  }
}

</mosaic_0001>

<llo_original>
// kernel: generator_forward.1
$region0: #{generator_forward.1}
  #allocation0 [shape = 'u32[]', space=smem, size = 0x4, offset = 0x4, fixed_abs, tag = 'smem constant byte address 0x4 - core index']
  #allocation1 [shape = 'u32[144,128]{1,0:T(1,128)}', space=vmem, size = 0x12000, scoped, tag = 'internal scratch']
  %s0 = inlined_call_operand.vmem [shape: bf16[8,4], index: 0, kind: input, shape index: {}]
  %s1 = inlined_call_operand.vmem [shape: bf16[4,128], index: 1, kind: input, shape index: {}]
  %s2 = inlined_call_operand.vmem [shape: f32[1,128], index: 2, kind: input, shape index: {}]
  %s3 = inlined_call_operand.vmem [shape: bf16[128,128], index: 3, kind: input, shape index: {}]
  %s4 = inlined_call_operand.vmem [shape: f32[1,128], index: 4, kind: input, shape index: {}]
  %s5 = inlined_call_operand.vmem [shape: bf16[128,128], index: 5, kind: input, shape index: {}]
  %s6 = inlined_call_operand.vmem [shape: f32[1,128], index: 6, kind: input, shape index: {}]
  %s7 = inlined_call_operand.vmem [shape: f32[8,128], index: 7, kind: output, shape index: {}]
  %s8 = sld [smem:[#allocation0]]
  $region38: #{generator_forward.1} parent=0
    _
  %s10 = ssub.s32 1, %s8
  %s11 = scalar_select 0, %s10, %s8
  // Predicated region
  $region2: #{generator_forward.1} parent=0 // pred_check
    _
  $region3: #{generator_forward.1} parent=0 // pred_check_branch
    %13 = sbr.rel (0) target = $region5
  $region4: #{generator_forward.1} parent=0 // pred_region
    _
  $region5: #{generator_forward.1} parent=0 // pred_fallthru
    _
  // Predicated region
  $region6: #{generator_forward.1} parent=0 // pred_check
    _
  $region7: #{generator_forward.1} parent=0 // pred_check_branch
    %15 = sbr.rel (0) target = $region9
  $region8: #{generator_forward.1} parent=0 // pred_region
    _
  $region9: #{generator_forward.1} parent=0 // pred_fallthru
    _
  // Predicated region
  $region10: #{generator_forward.1} parent=0 // pred_check
    _
  $region11: #{generator_forward.1} parent=0 // pred_check_branch
    %17 = sbr.rel (0) target = $region13
  $region12: #{generator_forward.1} parent=0 // pred_region
    _
  $region13: #{generator_forward.1} parent=0 // pred_fallthru
    _
  // Predicated region
  $region14: #{generator_forward.1} parent=0 // pred_check
    _
  $region15: #{generator_forward.1} parent=0 // pred_check_branch
    %19 = sbr.rel (0) target = $region17
  $region16: #{generator_forward.1} parent=0 // pred_region
    _
  $region17: #{generator_forward.1} parent=0 // pred_fallthru
    _
  // Predicated region
  $region18: #{generator_forward.1} parent=0 // pred_check
    _
  $region19: #{generator_forward.1} parent=0 // pred_check_branch
    %21 = sbr.rel (0) target = $region21
  $region20: #{generator_forward.1} parent=0 // pred_region
    _
  $region21: #{generator_forward.1} parent=0 // pred_fallthru
    _
  // Predicated region
  $region22: #{generator_forward.1} parent=0 // pred_check
    _
  $region23: #{generator_forward.1} parent=0 // pred_check_branch
    %23 = sbr.rel (0) target = $region25
  $region24: #{generator_forward.1} parent=0 // pred_region
    _
  $region25: #{generator_forward.1} parent=0 // pred_fallthru
    _
  // Predicated region
  $region26: #{generator_forward.1} parent=0 // pred_check
    _
  $region27: #{generator_forward.1} parent=0 // pred_check_branch
    %25 = sbr.rel (0) target = $region29
  $region28: #{generator_forward.1} parent=0 // pred_region
    _
  $region29: #{generator_forward.1} parent=0 // pred_fallthru
    _
  %v27 = vld [vmem:[%s0] sm:$0xf]
  %v28 = vld [vmem:[%s1] sm:$0x3]
  %v29 = vld [vmem:[%s2] sm:$0x1]
  %v31 = vlaneseq
  %v32 = vshrl.u32 %v31, 7
  %v33 = vsub.s32 0, %v32
  %v34 = vrot.slane %v29, %v33
  %vm36 = vcmask 31744
  %v38 = vsel %vm36, %v27, 0
  %vm40 = vcmask 1041408
  %v42 = vsel %vm40, %v28, 0
  %44 = vmatprep.subr.bf16.mxu0 0
  %45 = vmatpush1.bf16.msra.mxu0 %v42
  %46 = vmatprep.subr.bf16.mxu0 0
  %47 = vmatpush1.bf16.msra.mxu0 0
  %48 = vmatprep.subr.bf16.mxu0 0
  %49 = vmatpush1.bf16.msra.mxu0 0
  %50 = vmatprep.subr.bf16.mxu0 0
  %51 = vmatpush1.bf16.msra.mxu0 0
  %52 = vmatprep.subr.bf16.mxu0 0
  %53 = vmatpush1.bf16.msra.mxu0 0
  %54 = vmatprep.subr.bf16.mxu0 0
  %55 = vmatpush1.bf16.msra.mxu0 0
  %56 = vmatprep.subr.bf16.mxu0 0
  %57 = vmatpush1.bf16.msra.mxu0 0
  %58 = vmatprep.subr.bf16.mxu0 0
  %59 = vmatpush1.bf16.msra.mxu0 0
  %60 = vmatprep.subr.bf16.mxu0 0
  %61 = vmatpush1.bf16.msra.mxu0 0
  %62 = vmatprep.subr.bf16.mxu0 0
  %63 = vmatpush1.bf16.msra.mxu0 0
  %64 = vmatprep.subr.bf16.mxu0 0
  %65 = vmatpush1.bf16.msra.mxu0 0
  %66 = vmatprep.subr.bf16.mxu0 0
  %67 = vmatpush1.bf16.msra.mxu0 0
  %68 = vmatprep.subr.bf16.mxu0 0
  %69 = vmatpush1.bf16.msra.mxu0 0
  %70 = vmatprep.subr.bf16.mxu0 0
  %71 = vmatpush1.bf16.msra.mxu0 0
  %72 = vmatprep.subr.bf16.mxu0 0
  %73 = vmatpush1.bf16.msra.mxu0 0
  %74 = vmatprep.subr.bf16.mxu0 0
  %75 = vmatpush1.bf16.msra.mxu0 0
  %76 = vmatprep.mubr.bf16.mxu0 0
  %77 = vmatmul.mubr.bf16.gmra.mrb[0].mxu0 %v38
  %v78 = vpop.f32.mrb[0].mxu0
  %v79 = vadd.f32 %v34, %v78
  %v80 = vpop.f32.mrb[0].mxu0
  %v81 = vpop.f32.mrb[0].mxu0
  %v82 = vpop.f32.mrb[0].mxu0
  %83 = vdwg.mxu0
  %v84 = vtanh.pop %v79
  %v85 = vpack.c.bf16 %v84, %v84
  %v86 = vld [vmem:[%s3] sm:$0xf]
  %v87 = vld [vmem:[%s3 + $0x4] sm:$0xf]
  %v88 = vld [vmem:[%s3 + $0x8] sm:$0xf]
  %v89 = vld [vmem:[%s3 + $0xc] sm:$0xf]
  %v90 = vld [vmem:[%s3 + $0x10] sm:$0xf]
  %v91 = vld [vmem:[%s3 + $0x14] sm:$0xf]
  %v92 = vld [vmem:[%s3 + $0x18] sm:$0xf]
  %v93 = vld [vmem:[%s3 + $0x1c] sm:$0xf]
  %v94 = vld [vmem:[%s3 + $0x20] sm:$0xf]
  %v95 = vld [vmem:[%s3 + $0x24] sm:$0xf]
  %v96 = vld [vmem:[%s3 + $0x28] sm:$0xf]
  %v97 = vld [vmem:[%s3 + $0x2c] sm:$0xf]
  %v98 = vld [vmem:[%s3 + $0x30] sm:$0xf]
  %v99 = vld [vmem:[%s3 + $0x34] sm:$0xf]
  %v100 = vld [vmem:[%s3 + $0x38] sm:$0xf]
  %v101 = vld [vmem:[%s3 + $0x3c] sm:$0xf]
  %v102 = vld [vmem:[%s4] sm:$0x1]
  %v104 = vlaneseq
  %v105 = vshrl.u32 %v104, 7
  %v106 = vsub.s32 0, %v105
  %v107 = vrot.slane %v102, %v106
  %v125 = vunpack.c.l.b16 %v86
  %v126 = vunpack.c.l.b16 %v87
  %v127 = vunpack.c.l.b16 %v88
  %v128 = vunpack.c.l.b16 %v89
  %v129 = vunpack.c.l.b16 %v90
  %v130 = vunpack.c.l.b16 %v91
  %v131 = vunpack.c.l.b16 %v92
  %v132 = vunpack.c.l.b16 %v93
  %v133 = vunpack.c.l.b16 %v94
  %v134 = vunpack.c.l.b16 %v95
  %v135 = vunpack.c.l.b16 %v96
  %v136 = vunpack.c.l.b16 %v97
  %v137 = vunpack.c.l.b16 %v98
  %v138 = vunpack.c.l.b16 %v99
  %v139 = vunpack.c.l.b16 %v100
  %v140 = vunpack.c.l.b16 %v101
  %v141 = vpack.c.b16 %v126, %v125
  %v142 = vpack.c.b16 %v128, %v127
  %v143 = vpack.c.b16 %v130, %v129
  %v144 = vpack.c.b16 %v132, %v131
  %v145 = vpack.c.b16 %v134, %v133
  %v146 = vpack.c.b16 %v136, %v135
  %v147 = vpack.c.b16 %v138, %v137
  %v148 = vpack.c.b16 %v140, %v139
  %157 = vmatprep.subr.bf16.mxu0 0
  %158 = vmatpush1.bf16.msra.mxu0 %v141
  %159 = vmatprep.subr.bf16.mxu0 0
  %160 = vmatpush1.bf16.msra.mxu0 %v142
  %161 = vmatprep.subr.bf16.mxu0 0
  %162 = vmatpush1.bf16.msra.mxu0 %v143
  %163 = vmatprep.subr.bf16.mxu0 0
  %164 = vmatpush1.bf16.msra.mxu0 %v144
  %165 = vmatprep.subr.bf16.mxu0 0
  %166 = vmatpush1.bf16.msra.mxu0 %v145
  %167 = vmatprep.subr.bf16.mxu0 0
  %168 = vmatpush1.bf16.msra.mxu0 %v146
  %169 = vmatprep.subr.bf16.mxu0 0
  %170 = vmatpush1.bf16.msra.mxu0 %v147
  %171 = vmatprep.subr.bf16.mxu0 0
  %172 = vmatpush1.bf16.msra.mxu0 %v148
  %173 = vmatprep.subr.bf16.mxu0 0
  %174 = vmatpush1.bf16.msra.mxu0 0
  %175 = vmatprep.subr.bf16.mxu0 0
  %176 = vmatpush1.bf16.msra.mxu0 0
  %177 = vmatprep.subr.bf16.mxu0 0
  %178 = vmatpush1.bf16.msra.mxu0 0
  %179 = vmatprep.subr.bf16.mxu0 0
  %180 = vmatpush1.bf16.msra.mxu0 0
  %181 = vmatprep.subr.bf16.mxu0 0
  %182 = vmatpush1.bf16.msra.mxu0 0
  %183 = vmatprep.subr.bf16.mxu0 0
  %184 = vmatpush1.bf16.msra.mxu0 0
  %185 = vmatprep.subr.bf16.mxu0 0
  %186 = vmatpush1.bf16.msra.mxu0 0
  %187 = vmatprep.subr.bf16.mxu0 0
  %188 = vmatpush1.bf16.msra.mxu0 0
  %189 = vmatprep.mubr.bf16.mxu0 0
  %190 = vmatmul.mubr.bf16.gmra.mrb[0].mxu0 %v85
  %v191 = vpop.f32.mrb[0].mxu0
  %v192 = vadd.f32 %v107, %v191
  %v193 = vpop.f32.mrb[0].mxu0
  %v194 = vpop.f32.mrb[0].mxu0
  %v195 = vpop.f32.mrb[0].mxu0
  %196 = vdwg.mxu0
  %v197 = vtanh.pop %v192
  %v198 = vpack.c.bf16 %v197, %v197
  %v199 = vld [vmem:[%s5] sm:$0xf]
  %v200 = vld [vmem:[%s5 + $0x4] sm:$0xf]
  %v201 = vld [vmem:[%s5 + $0x8] sm:$0xf]
  %v202 = vld [vmem:[%s5 + $0xc] sm:$0xf]
  %v203 = vld [vmem:[%s5 + $0x10] sm:$0xf]
  %v204 = vld [vmem:[%s5 + $0x14] sm:$0xf]
  %v205 = vld [vmem:[%s5 + $0x18] sm:$0xf]
  %v206 = vld [vmem:[%s5 + $0x1c] sm:$0xf]
  %v207 = vld [vmem:[%s5 + $0x20] sm:$0xf]
  %v208 = vld [vmem:[%s5 + $0x24] sm:$0xf]
  %v209 = vld [vmem:[%s5 + $0x28] sm:$0xf]
  %v210 = vld [vmem:[%s5 + $0x2c] sm:$0xf]
  %v211 = vld [vmem:[%s5 + $0x30] sm:$0xf]
  %v212 = vld [vmem:[%s5 + $0x34] sm:$0xf]
  %v213 = vld [vmem:[%s5 + $0x38] sm:$0xf]
  %v214 = vld [vmem:[%s5 + $0x3c] sm:$0xf]
  %v215 = vld [vmem:[%s6] sm:$0x1]
  %v217 = vlaneseq
  %v218 = vshrl.u32 %v217, 7
  %v219 = vsub.s32 0, %v218
  %v220 = vrot.slane %v215, %v219
  %v238 = vunpack.c.l.b16 %v199
  %v239 = vunpack.c.l.b16 %v200
  %v240 = vunpack.c.l.b16 %v201
  %v241 = vunpack.c.l.b16 %v202
  %v242 = vunpack.c.l.b16 %v203
  %v243 = vunpack.c.l.b16 %v204
  %v244 = vunpack.c.l.b16 %v205
  %v245 = vunpack.c.l.b16 %v206
  %v246 = vunpack.c.l.b16 %v207
  %v247 = vunpack.c.l.b16 %v208
  %v248 = vunpack.c.l.b16 %v209
  %v249 = vunpack.c.l.b16 %v210
  %v250 = vunpack.c.l.b16 %v211
  %v251 = vunpack.c.l.b16 %v212
  %v252 = vunpack.c.l.b16 %v213
  %v253 = vunpack.c.l.b16 %v214
  %v254 = vpack.c.b16 %v239, %v238
  %v255 = vpack.c.b16 %v241, %v240
  %v256 = vpack.c.b16 %v243, %v242
  %v257 = vpack.c.b16 %v245, %v244
  %v258 = vpack.c.b16 %v247, %v246
  %v259 = vpack.c.b16 %v249, %v248
  %v260 = vpack.c.b16 %v251, %v250
  %v261 = vpack.c.b16 %v253, %v252
  %270 = vmatprep.subr.bf16.mxu0 0
  %271 = vmatpush1.bf16.msra.mxu0 %v254
  %272 = vmatprep.subr.bf16.mxu0 0
  %273 = vmatpush1.bf16.msra.mxu0 %v255
  %274 = vmatprep.subr.bf16.mxu0 0
  %275 = vmatpush1.bf16.msra.mxu0 %v256
  %276 = vmatprep.subr.bf16.mxu0 0
  %277 = vmatpush1.bf16.msra.mxu0 %v257
  %278 = vmatprep.subr.bf16.mxu0 0
  %279 = vmatpush1.bf16.msra.mxu0 %v258
  %280 = vmatprep.subr.bf16.mxu0 0
  %281 = vmatpush1.bf16.msra.mxu0 %v259
  %282 = vmatprep.subr.bf16.mxu0 0
  %283 = vmatpush1.bf16.msra.mxu0 %v260
  %284 = vmatprep.subr.bf16.mxu0 0
  %285 = vmatpush1.bf16.msra.mxu0 %v261
  %286 = vmatprep.subr.bf16.mxu0 0
  %287 = vmatpush1.bf16.msra.mxu0 0
  %288 = vmatprep.subr.bf16.mxu0 0
  %289 = vmatpush1.bf16.msra.mxu0 0
  %290 = vmatprep.subr.bf16.mxu0 0
  %291 = vmatpush1.bf16.msra.mxu0 0
  %292 = vmatprep.subr.bf16.mxu0 0
  %293 = vmatpush1.bf16.msra.mxu0 0
  %294 = vmatprep.subr.bf16.mxu0 0
  %295 = vmatpush1.bf16.msra.mxu0 0
  %296 = vmatprep.subr.bf16.mxu0 0
  %297 = vmatpush1.bf16.msra.mxu0 0
  %298 = vmatprep.subr.bf16.mxu0 0
  %299 = vmatpush1.bf16.msra.mxu0 0
  %300 = vmatprep.subr.bf16.mxu0 0
  %301 = vmatpush1.bf16.msra.mxu0 0
  %302 = vmatprep.mubr.bf16.mxu0 0
  %303 = vmatmul.mubr.bf16.gmra.mrb[0].mxu0 %v198
  %v304 = vpop.f32.mrb[0].mxu0
  %v305 = vadd.f32 %v220, %v304
  %v306 = vpop.f32.mrb[0].mxu0
  %v307 = vpop.f32.mrb[0].mxu0
  %v308 = vpop.f32.mrb[0].mxu0
  %309 = vdwg.mxu0
  %310 = vst [vmem:[%s7] sm:$0xff] %v305
  // Predicated region
  $region30: #{generator_forward.1} parent=0 // pred_check
    _
  $region31: #{generator_forward.1} parent=0 // pred_check_branch
    %312 = sbr.rel (0) target = $region33
  $region32: #{generator_forward.1} parent=0 // pred_region
    _
  $region33: #{generator_forward.1} parent=0 // pred_fallthru
    _
  // Predicated region
  $region34: #{generator_forward.1} parent=0 // pred_check
    _
  $region35: #{generator_forward.1} parent=0 // pred_check_branch
    %314 = sbr.rel (0) target = $region37
  $region36: #{generator_forward.1} parent=0 // pred_region
    _
  $region37: #{generator_forward.1} parent=0 // pred_fallthru
    _

</llo_original>
